<compile_context>
chip_gen: v7x
topology: tpu7x:2x2x1
jax: 0.10.0
libtpu: 0.0.40
codegen_flags: <defaults>
</compile_context>

<pallas_src>
import jax
import jax.numpy as jnp
from jax.experimental import pallas as pl
from jax.experimental.pallas import tpu as pltpu


def _normalize_kernel(x_ref, mu_ref, inv_ref, o_ref):
    # out = (x - mu) * inv_sigma
    # mu_ref / inv_ref are the full (NRp, 1) per-row columns, DMA'd once and
    # resident in VMEM; slice the rows belonging to this grid step.
    rows = x_ref.shape[0]
    start = pl.multiple_of(pl.program_id(0) * rows, 8)
    mu = mu_ref[pl.ds(start, rows), :]     # (rows, 1) -> broadcast over lanes
    inv = inv_ref[pl.ds(start, rows), :]
    o_ref[...] = (x_ref[...] - mu) * inv


def _choose_row_tile(nr, row_bytes, target_block_bytes):
    """Largest multiple-of-8 divisor of nr whose (rows x lanes) block stays
    under target_block_bytes; prefer >= 2 grid steps (v7x 2-TC sharding)."""
    max_rows = max(8, int(target_block_bytes // max(row_bytes, 1)))
    best = 8
    r = 8
    while r <= nr:
        if nr % r == 0 and r <= max_rows:
            best = r
        r += 8
    # Keep at least 2 grid steps when possible so dimension_semantics can
    # shard across the 2 TensorCores on v7x (no-op on v5e/v6e).
    if best == nr and nr >= 16 and (nr // 2) % 8 == 0:
        best = nr // 2
    return best


def normalize_layer_forward(x, mu, sigma, *, target_block_bytes=4 * 1024 * 1024):
    """x: (N, C, H, W) float; mu, sigma: (C,) constants with sigma > 0."""
    N, C, H, W = x.shape
    NR, L = N * C, H * W
    itemsize = jnp.dtype(x.dtype).itemsize

    # --- wrapper-side layout plumbing (no extra compute) -------------------
    # Flatten NCHW -> (N*C, H*W): rows = (batch, channel), lanes = spatial.
    x2 = x.reshape(NR, L)

    # Lane-dense output: pad the lane axis up to a multiple of 128.
    Lp = ((L + 127) // 128) * 128
    if Lp != L:
        x2 = jnp.pad(x2, ((0, 0), (0, Lp - L)))

    # Pad rows up to a multiple of 8 (sublane granularity).
    NRp = ((NR + 7) // 8) * 8
    if NRp != NR:
        x2 = jnp.pad(x2, ((0, NRp - NR), (0, 0)))

    # Per-row parameter columns; exp hoisted out of the kernel:
    # 1/sigma == exp(-log(sigma)), computed once here.
    mu_rows = jnp.tile(mu.astype(x.dtype).reshape(C), (N,))
    inv_rows = jnp.tile((1.0 / sigma).astype(x.dtype).reshape(C), (N,))
    if NRp != NR:
        mu_rows = jnp.pad(mu_rows, (0, NRp - NR))
        inv_rows = jnp.pad(inv_rows, (0, NRp - NR), constant_values=1.0)
    mu_col = mu_rows.reshape(NRp, 1)
    inv_col = inv_rows.reshape(NRp, 1)

    # --- tiling: large blocks, short grid ----------------------------------
    row_tile = _choose_row_tile(NRp, Lp * itemsize, target_block_bytes)
    grid = (NRp // row_tile,)

    out2 = pl.pallas_call(
        _normalize_kernel,
        out_shape=jax.ShapeDtypeStruct((NRp, Lp), x.dtype),
        grid_spec=pltpu.PrefetchScalarGridSpec(
            num_scalar_prefetch=0,
            grid=grid,
            in_specs=[
                # x: large tiles, double-buffered by the auto-pipeline.
                pl.BlockSpec((row_tile, Lp), lambda i: (i, 0)),
                # mu / inv_sigma: full-extent blocks + constant index_map ->
                # single DMA, VMEM-resident across all grid steps (no extra
                # per-step DMA streams / semaphores).
                pl.BlockSpec((NRp, 1), lambda i: (0, 0)),
                pl.BlockSpec((NRp, 1), lambda i: (0, 0)),
            ],
            out_specs=pl.BlockSpec((row_tile, Lp), lambda i: (i, 0)),
        ),
        compiler_params=pltpu.CompilerParams(
            dimension_semantics=("parallel",),
            # Explicit scoped-VMEM budget: (x + out) blocks x 2 buffers at the
            # ~4 MiB target is ~16 MiB, portable across v5e/v6e/v7x.
            vmem_limit_bytes=32 * 1024 * 1024,
        ),
    )(x2, mu_col, inv_col)

    out2 = out2[:NR, :L]
    return out2.reshape(N, C, H, W)


def _reference(x, mu, sigma):
    C = x.shape[1]
    return (x - mu.reshape(1, C, 1, 1)) / jnp.exp(jnp.log(sigma)).reshape(1, C, 1, 1)


if __name__ == "__main__":
    key = jax.random.PRNGKey(0)

    # Deterministic "module parameters": per-channel mu / sigma
    # (equivalent to NormalizeLayer(dim=(C,1,1), mu=..., sigma=...)).
    N, C, H, W = 2, 4, 16, 16
    mu = jnp.array([0.485, 0.456, 0.406, 0.5], dtype=jnp.float32)
    sigma = jnp.array([0.229, 0.224, 0.225, 0.25], dtype=jnp.float32)
    x = jax.random.normal(key, (N, C, H, W), dtype=jnp.float32)

    out = jax.block_until_ready(normalize_layer_forward(x, mu, sigma))
    ref = _reference(x, mu, sigma)
    assert out.shape == x.shape and out.dtype == x.dtype
    assert jnp.allclose(out, ref, atol=1e-5, rtol=1e-5)

    # Also exercise the non-multiple-of-128 / non-multiple-of-8 padding path
    # (LeNet / MNIST-like 28x28 single-channel input).
    key2 = jax.random.PRNGKey(0)
    mu2 = jnp.array([0.1307], dtype=jnp.float32)
    sigma2 = jnp.array([0.3081], dtype=jnp.float32)
    x2 = jax.random.normal(key2, (2, 1, 28, 28), dtype=jnp.float32)
    out2 = jax.block_until_ready(normalize_layer_forward(x2, mu2, sigma2))
    ref2 = _reference(x2, mu2, sigma2)
    assert out2.shape == x2.shape and out2.dtype == x2.dtype
    assert jnp.allclose(out2, ref2, atol=1e-5, rtol=1e-5)

    print("KERNEL_OK")
</pallas_src>

<mosaic_0001>
module attributes {stable_mosaic.version = 11 : i64} {
  func.func @_normalize_kernel(%arg0: i32, %arg1: memref<8x256xf32, #tpu.memory_space<vmem>>, %arg2: memref<8x1xf32, #tpu.memory_space<vmem>>, %arg3: memref<8x1xf32, #tpu.memory_space<vmem>>, %arg4: memref<8x256xf32, #tpu.memory_space<vmem>>) attributes {dimension_semantics = [#tpu.dimension_semantics<parallel>], iteration_bounds = array<i64: 1>, scalar_prefetch = 0 : i64, scratch_operands = 0 : i64, tpu.core_type = #tpu.core_type<tc>, window_params = [{transform_indices = @transform_0, window_bounds = array<i64: 8, 256>}, {pipeline_mode = #tpu.pipeline_mode<synchronous>, transform_indices = @transform_1, window_bounds = array<i64: 8, 1>}, {pipeline_mode = #tpu.pipeline_mode<synchronous>, transform_indices = @transform_2, window_bounds = array<i64: 8, 1>}, {transform_indices = @transform_3, window_bounds = array<i64: 8, 256>}]} {
    %c8_i32 = arith.constant 8 : i32
    %0 = arith.muli %arg0, %c8_i32 : i32
    %1 = tpu.assume_multiple %0, 8 : i32
    %2 = arith.index_cast %1 : i32 to index
    %c0 = arith.constant 0 : index
    %3 = vector.load %arg2[%2, %c0] : memref<8x1xf32, #tpu.memory_space<vmem>>, vector<8x1xf32>
    %4 = arith.index_cast %1 : i32 to index
    %c0_0 = arith.constant 0 : index
    %5 = vector.load %arg3[%4, %c0_0] : memref<8x1xf32, #tpu.memory_space<vmem>>, vector<8x1xf32>
    %c0_1 = arith.constant 0 : index
    %c0_2 = arith.constant 0 : index
    %6 = vector.load %arg1[%c0_1, %c0_2] : memref<8x256xf32, #tpu.memory_space<vmem>>, vector<8x256xf32>
    %7 = vector.broadcast %3 : vector<8x1xf32> to vector<8x256xf32>
    %8 = arith.subf %6, %7 : vector<8x256xf32>
    %9 = vector.broadcast %5 : vector<8x1xf32> to vector<8x256xf32>
    %10 = arith.mulf %8, %9 : vector<8x256xf32>
    %c0_3 = arith.constant 0 : index
    %c0_4 = arith.constant 0 : index
    %11 = vector.load %arg4[%c0_3, %c0_4] : memref<8x256xf32, #tpu.memory_space<vmem>>, vector<8x256xf32>
    tpu.vector_store %arg4[%c0_3, %c0_4], %10 {strides = array<i32>} : memref<8x256xf32, #tpu.memory_space<vmem>>, vector<8x256xf32>,
    return
  }
  func.func @transform_0(%arg0: i32) -> (i32, i32) {
    %c0_i32 = arith.constant 0 : i32
    %c0_i32_0 = arith.constant 0 : i32
    return %arg0, %c0_i32 : i32, i32
  }
  func.func @transform_1(%arg0: i32) -> (i32, i32) {
    %c0_i32 = arith.constant 0 : i32
    %c0_i32_0 = arith.constant 0 : i32
    %c0_i32_1 = arith.constant 0 : i32
    return %c0_i32, %c0_i32_0 : i32, i32
  }
  func.func @transform_2(%arg0: i32) -> (i32, i32) {
    %c0_i32 = arith.constant 0 : i32
    %c0_i32_0 = arith.constant 0 : i32
    %c0_i32_1 = arith.constant 0 : i32
    return %c0_i32, %c0_i32_0 : i32, i32
  }
  func.func @transform_3(%arg0: i32) -> (i32, i32) {
    %c0_i32 = arith.constant 0 : i32
    %c0_i32_0 = arith.constant 0 : i32
    return %arg0, %c0_i32 : i32, i32
  }
}

</mosaic_0001>

<llo_original>
// kernel: tpu_custom_call.1
$region0: #{tpu_custom_call.1}
  #allocation0 [shape = 'u32[]', space=smem, size = 0x4, offset = 0x4, fixed_abs, tag = 'smem constant byte address 0x4 - core index']
  #allocation1 [shape = 'u32[144,128]{1,0:T(1,128)}', space=vmem, size = 0x12000, scoped, tag = 'internal scratch']
  %s0 = inlined_call_operand.vmem [shape: f32[8,256], index: 0, kind: input, shape index: {}]
  %s1 = inlined_call_operand.vmem [shape: f32[8,1], index: 1, kind: input, shape index: {}]
  %s2 = inlined_call_operand.vmem [shape: f32[8,1], index: 2, kind: input, shape index: {}]
  %s3 = inlined_call_operand.hbm [shape: f32[8,256], index: 3, kind: output, shape index: {}]
  %s4 = sld [smem:[#allocation0]]
  $region22: #{tpu_custom_call.1} parent=0
    _
  %s6 = ssub.s32 1, %s4
  %s7 = scalar_select 0, %s6, %s4
  $region1: #{tpu_custom_call.1} parent=0
    #allocation2 [shape = 'u8[8192]{0}', space=vmem, size = 0x2000, scoped, tag = 'output window, operand 0, single buffered']
    #allocation3 [shape = 's32[1]{0}', space=sflag, size = 0x4, scoped, tag = 'scoped memory for tpu_custom_call.1']
    %8 = vsyncpa [#allocation3], 0
    // Predicated region
    $region2: #{tpu_custom_call.1} parent=1 // pred_check
      _
    $region3: #{tpu_custom_call.1} parent=1 // pred_check_branch
      %10 = sbr.rel (0) target = $region5
    $region4: #{tpu_custom_call.1} parent=1 // pred_region
      _
    $region5: #{tpu_custom_call.1} parent=1 // pred_fallthru
      _
    // Predicated region
    $region6: #{tpu_custom_call.1} parent=1 // pred_check
      _
    $region7: #{tpu_custom_call.1} parent=1 // pred_check_branch
      %12 = sbr.rel (0) target = $region9
    $region8: #{tpu_custom_call.1} parent=1 // pred_region
      _
    $region9: #{tpu_custom_call.1} parent=1 // pred_fallthru
      _
    // Predicated region
    $region10: #{tpu_custom_call.1} parent=1 // pred_check
      _
    $region11: #{tpu_custom_call.1} parent=1 // pred_check_branch
      %14 = sbr.rel (0) target = $region13
    $region12: #{tpu_custom_call.1} parent=1 // pred_region
      _
    $region13: #{tpu_custom_call.1} parent=1 // pred_fallthru
      _
    %s15 = smul.u32 0, 8
    %s16 = scalar_lea.vmem %s1, %s15
    %v17 = vld [vmem:[%s16] sm:$0xff]
    %s18 = scalar_lea.vmem %s2, %s15
    %v19 = vld [vmem:[%s18] sm:$0xff]
    %v20 = vld [vmem:[%s0] sm:$0xff]
    %v21 = vld [vmem:[%s0 + $0x8] sm:$0xff]
    %23 = vset.pattern.permute.xlu0 0
    %24 = vperm.xlu0 %23, %v17
    %v25 = vpop.permute.xlu0 %24
    %v27 = vsub.f32 %v20, %v25
    %v28 = vsub.f32 %v21, %v25
    %30 = vset.pattern.permute.xlu0 0
    %31 = vperm.xlu0 %30, %v19
    %v32 = vpop.permute.xlu0 %31
    %v34 = vmul.f32 %v27, %v32
    %v35 = vmul.f32 %v28, %v32
    %36 = vst [vmem:[#allocation2] sm:$0xff] %v34
    %37 = vst [vmem:[#allocation2 + $0x8] sm:$0xff] %v35
    // Predicated region
    $region14: #{tpu_custom_call.1} parent=1 // pred_check
      _
    $region15: #{tpu_custom_call.1} parent=1 // pred_check_branch
      %39 = sbr.rel (0) target = $region17
    $region16: #{tpu_custom_call.1} parent=1 // pred_region
      %s41 = ssub.s32 256, 256
      %42 = vsyncadd [#allocation3], %s41
      %s44 = sshll.u32 [#allocation2], 4
      %s45 = int_to_ptr.vmem [resolvable:$true] %s44
      %47 = dma.vmem_to_hbm [thread:$0]  %s45, 256, %s3, [#allocation3]
    $region17: #{tpu_custom_call.1} parent=1 // pred_fallthru
      _
    // Predicated region
    $region18: #{tpu_custom_call.1} parent=1 // pred_check
      _
    $region19: #{tpu_custom_call.1} parent=1 // pred_check_branch
      %49 = sbr.rel (0) target = $region21
    $region20: #{tpu_custom_call.1} parent=1 // pred_region
      %50 = dma.done [#allocation3], 256
    $region21: #{tpu_custom_call.1} parent=1 // pred_fallthru
      _
    %51 = vsyncpa [#allocation3], 1

</llo_original>
